<compile_context>
chip_gen: v5e
topology: v5e:2x2
jax: 0.10.0
libtpu: 0.0.40
codegen_flags: <defaults>
</compile_context>

<pallas_src>
import functools

import jax
import jax.numpy as jnp
import numpy as np
from jax.experimental import pallas as pl
from jax.experimental.pallas import tpu as pltpu


# --------------------- Kernel A: hoisted input projection --------------------
def _matmul_bias_kernel(x_ref, w_ref, b_ref, o_ref):
    # o = x @ w + b   (one big MXU matmul for all S*B rows; bias folded here
    # once instead of every timestep inside the recurrence).
    o_ref[...] = (jnp.dot(x_ref[...], w_ref[...],
                          preferred_element_type=jnp.float32) + b_ref[...])


def input_projection(x2d, w_t, bias_2d):
    """x2d: (S*B, Din), w_t: (Din, 4H), bias_2d: (1, 4H) -> (S*B, 4H)."""
    M = x2d.shape[0]
    N = w_t.shape[1]
    # Small shapes: full arrays fit VMEM easily; tile rows for very large S*B.
    return pl.pallas_call(
        _matmul_bias_kernel,
        out_shape=jax.ShapeDtypeStruct((M, N), jnp.float32),
    )(x2d, w_t, bias_2d)


# ----------------------- shared recurrence step (traced) ----------------------
def _lstm_step(gates, h, c, hidden_size):
    H = hidden_size
    # NOTE: at H < 128 these slices cut a 128-lane vreg at 32-lane boundaries;
    # acceptable at demo sizes (real configs should keep H a multiple of 128).
    i_g = jax.nn.sigmoid(gates[:, 0 * H:1 * H])
    f_g = jax.nn.sigmoid(gates[:, 1 * H:2 * H])
    g_g = jnp.tanh(gates[:, 2 * H:3 * H])
    o_g = jax.nn.sigmoid(gates[:, 3 * H:4 * H])
    c_new = f_g * c + i_g * g_g
    h_new = o_g * jnp.tanh(c_new)
    return h_new, c_new


# -------- Kernel B: recurrence, full hidden-sequence output (mid layers) ------
def _lstm_seq_kernel(gx_ref, whh_ref, hseq_ref, h_scr, c_scr,
                     *, hidden_size, chunk):
    c_idx = pl.program_id(0)

    @pl.when(c_idx == 0)
    def _():
        h_scr[...] = jnp.zeros_like(h_scr)
        c_scr[...] = jnp.zeros_like(c_scr)

    whh = whh_ref[...]  # load the (H, 4H) weight once per grid step

    def step(t, carry):
        h, c = carry
        gates = gx_ref[t] + jnp.dot(h, whh, preferred_element_type=jnp.float32)
        h_new, c_new = _lstm_step(gates, h, c, hidden_size)
        hseq_ref[t] = h_new
        return h_new, c_new

    unroll = True if chunk <= 16 else 8
    h, c = jax.lax.fori_loop(0, chunk, step, (h_scr[...], c_scr[...]),
                             unroll=unroll)
    h_scr[...] = h
    c_scr[...] = c


# ------ Kernel C: recurrence + fused FC, only (B, C) output (last layer) ------
def _lstm_fc_kernel(gx_ref, whh_ref, fcw_ref, fcb_ref, out_ref, h_scr, c_scr,
                    *, hidden_size, chunk):
    c_idx = pl.program_id(0)

    @pl.when(c_idx == 0)
    def _():
        h_scr[...] = jnp.zeros_like(h_scr)
        c_scr[...] = jnp.zeros_like(c_scr)

    whh = whh_ref[...]

    def step(t, carry):
        h, c = carry
        gates = gx_ref[t] + jnp.dot(h, whh, preferred_element_type=jnp.float32)
        return _lstm_step(gates, h, c, hidden_size)

    unroll = True if chunk <= 16 else 8
    h, c = jax.lax.fori_loop(0, chunk, step, (h_scr[...], c_scr[...]),
                             unroll=unroll)
    h_scr[...] = h
    c_scr[...] = c

    # Fused FC on the very last time-chunk: write only the (B, C) result.
    @pl.when(c_idx == pl.num_programs(0) - 1)
    def _():
        out_ref[...] = (jnp.dot(h, fcw_ref[...],
                                preferred_element_type=jnp.float32)
                        + fcb_ref[...])


# ------------------------------ pallas_call wrappers ---------------------------
def _pick_chunk(S, max_chunk=64):
    tc = min(S, max_chunk)
    while S % tc:
        tc -= 1
    return tc


_VMEM_LIMIT = 32 * 1024 * 1024  # conservative for v7x's 64 MiB physical VMEM


def lstm_recurrence_seq(gx, w_hh_t):
    """gx: (S, B, 4H) precomputed input gates; returns full (S, B, H) sequence."""
    S, B, H4 = gx.shape
    H = w_hh_t.shape[0]
    Tc = _pick_chunk(S)
    kernel = functools.partial(_lstm_seq_kernel, hidden_size=H, chunk=Tc)
    return pl.pallas_call(
        kernel,
        out_shape=jax.ShapeDtypeStruct((S, B, H), jnp.float32),
        grid_spec=pltpu.PrefetchScalarGridSpec(
            num_scalar_prefetch=0,
            grid=(S // Tc,),
            in_specs=[
                pl.BlockSpec((Tc, B, H4), lambda c: (c, 0, 0)),
                # constant-index weight block (could be Buffered(1); irrelevant
                # at H=32 VMEM footprint)
                pl.BlockSpec((H, H4), lambda c: (0, 0)),
            ],
            out_specs=pl.BlockSpec((Tc, B, H), lambda c: (c, 0, 0)),
            scratch_shapes=[pltpu.VMEM((B, H), jnp.float32),   # h state
                            pltpu.VMEM((B, H), jnp.float32)],  # c state
        ),
        compiler_params=pltpu.CompilerParams(
            dimension_semantics=("arbitrary",),       # recurrence is sequential
            vmem_limit_bytes=_VMEM_LIMIT),
    )(gx, w_hh_t)


def lstm_recurrence_fc(gx, w_hh_t, fc_w_t, fc_b2):
    """gx: (S, B, 4H); fused FC on last hidden state -> (B, C) only."""
    S, B, H4 = gx.shape
    H = w_hh_t.shape[0]
    C = fc_w_t.shape[1]
    Tc = _pick_chunk(S)
    kernel = functools.partial(_lstm_fc_kernel, hidden_size=H, chunk=Tc)
    return pl.pallas_call(
        kernel,
        out_shape=jax.ShapeDtypeStruct((B, C), jnp.float32),
        grid_spec=pltpu.PrefetchScalarGridSpec(
            num_scalar_prefetch=0,
            grid=(S // Tc,),
            in_specs=[
                pl.BlockSpec((Tc, B, H4), lambda c: (c, 0, 0)),
                pl.BlockSpec((H, H4), lambda c: (0, 0)),
                pl.BlockSpec((H, C), lambda c: (0, 0)),
                pl.BlockSpec((1, C), lambda c: (0, 0)),
            ],
            # Constant output index: (B, C) stays resident in VMEM and is
            # written back to HBM exactly once (finalize pattern).
            out_specs=pl.BlockSpec((B, C), lambda c: (0, 0)),
            scratch_shapes=[pltpu.VMEM((B, H), jnp.float32),
                            pltpu.VMEM((B, H), jnp.float32)],
        ),
        compiler_params=pltpu.CompilerParams(
            dimension_semantics=("arbitrary",),
            vmem_limit_bytes=_VMEM_LIMIT),
    )(gx, w_hh_t, fc_w_t, fc_b2)


# ------------------------------- Full network ---------------------------------
def prepare_params(params):
    """One-time parameter prep (transposes + bias sums), outside the forward."""
    layers = []
    for (w_ih, w_hh, b_ih, b_hh) in params["lstm_layers"]:
        layers.append((jnp.transpose(w_ih).astype(jnp.float32),      # (Din, 4H)
                       jnp.transpose(w_hh).astype(jnp.float32),      # (H, 4H)
                       (b_ih + b_hh)[None, :].astype(jnp.float32)))  # (1, 4H)
    return {
        "layers": layers,
        "fc_w_t": jnp.transpose(params["fc_w"]).astype(jnp.float32),  # (H, C)
        "fc_b": params["fc_b"][None, :].astype(jnp.float32),          # (1, C)
    }


def network_single_lstm_forward(x, prep):
    """x: (B, S, D) batch-first, like the PyTorch module. Returns (B, C)."""
    x = x.astype(jnp.float32)
    B, S, _ = x.shape
    seq_in = jnp.transpose(x, (1, 0, 2))            # time-major (S, B, Din)
    n_layers = len(prep["layers"])
    out = None
    for li, (w_ih_t, w_hh_t, bias) in enumerate(prep["layers"]):
        d_in = w_ih_t.shape[0]
        H = w_hh_t.shape[0]
        # Hoisted input projection: one big matmul over all timesteps.
        gx = input_projection(seq_in.reshape(S * B, d_in), w_ih_t, bias)
        gx = gx.reshape(S, B, 4 * H)
        if li == n_layers - 1:
            out = lstm_recurrence_fc(gx, w_hh_t, prep["fc_w_t"], prep["fc_b"])
        else:
            seq_in = lstm_recurrence_seq(gx, w_hh_t)
            # TODO(synk): inter-layer dropout (p=0.3, training mode only) is not
            # applied; this matches eval-mode semantics.
    return out


# --------------------------- Pure-JAX reference check --------------------------
def reference_forward(x, params):
    x = x.astype(jnp.float32)
    B = x.shape[0]
    h_seq = jnp.transpose(x, (1, 0, 2))
    for (w_ih, w_hh, b_ih, b_hh) in params["lstm_layers"]:
        H = w_hh.shape[1]

        def step(carry, x_t):
            h, c = carry
            gates = x_t @ w_ih.T + b_ih + h @ w_hh.T + b_hh
            i = jax.nn.sigmoid(gates[:, 0 * H:1 * H])
            f = jax.nn.sigmoid(gates[:, 1 * H:2 * H])
            g = jnp.tanh(gates[:, 2 * H:3 * H])
            o = jax.nn.sigmoid(gates[:, 3 * H:4 * H])
            c_new = f * c + i * g
            h_new = o * jnp.tanh(c_new)
            return (h_new, c_new), h_new

        init = (jnp.zeros((B, H), jnp.float32), jnp.zeros((B, H), jnp.float32))
        _, h_seq = jax.lax.scan(step, init, h_seq)
    return h_seq[-1] @ params["fc_w"].T + params["fc_b"]


# ------------------------------------ Main -------------------------------------
def _make_params(key, input_size, hidden_size, num_layers, num_classes):
    bound = 1.0 / np.sqrt(hidden_size)
    lstm_layers = []
    in_dim = input_size
    for _ in range(num_layers):
        k1, k2, k3, k4, key = jax.random.split(key, 5)
        w_ih = jax.random.uniform(k1, (4 * hidden_size, in_dim),
                                  minval=-bound, maxval=bound, dtype=jnp.float32)
        w_hh = jax.random.uniform(k2, (4 * hidden_size, hidden_size),
                                  minval=-bound, maxval=bound, dtype=jnp.float32)
        b_ih = jax.random.uniform(k3, (4 * hidden_size,),
                                  minval=-bound, maxval=bound, dtype=jnp.float32)
        b_hh = jax.random.uniform(k4, (4 * hidden_size,),
                                  minval=-bound, maxval=bound, dtype=jnp.float32)
        lstm_layers.append((w_ih, w_hh, b_ih, b_hh))
        in_dim = hidden_size
    k5, k6, key = jax.random.split(key, 3)
    fc_w = jax.random.uniform(k5, (num_classes, hidden_size),
                              minval=-bound, maxval=bound, dtype=jnp.float32)
    fc_b = jax.random.uniform(k6, (num_classes,),
                              minval=-bound, maxval=bound, dtype=jnp.float32)
    return {"lstm_layers": lstm_layers, "fc_w": fc_w, "fc_b": fc_b}, key


if __name__ == "__main__":
    B, S = 2, 8
    input_size = 16
    hidden_size = 32
    num_classes = 4

    key = jax.random.PRNGKey(0)
    k_x, key = jax.random.split(key)
    x = jax.random.normal(k_x, (B, S, input_size), dtype=jnp.float32)

    fwd = jax.jit(network_single_lstm_forward)

    # --- single-layer config (the module's namesake) ---
    params1, key = _make_params(key, input_size, hidden_size, 1, num_classes)
    out1 = jax.block_until_ready(fwd(x, prepare_params(params1)))
    ref1 = jax.block_until_ready(reference_forward(x, params1))
    np.testing.assert_allclose(np.asarray(out1), np.asarray(ref1),
                               rtol=1e-4, atol=1e-4)
    assert out1.shape == (B, num_classes)

    # --- 2-layer config (exercises the full-sequence intermediate kernel;
    #     eval-mode so dropout is a no-op) ---
    params2, key = _make_params(key, input_size, hidden_size, 2, num_classes)
    out2 = jax.block_until_ready(fwd(x, prepare_params(params2)))
    ref2 = jax.block_until_ready(reference_forward(x, params2))
    np.testing.assert_allclose(np.asarray(out2), np.asarray(ref2),
                               rtol=1e-4, atol=1e-4)
    assert out2.shape == (B, num_classes)

    print("KERNEL_OK")
</pallas_src>

<mosaic_0001>
module attributes {stable_mosaic.version = 11 : i64} {
  func.func @_matmul_bias_kernel(%arg0: memref<16x16xf32, #tpu.memory_space<vmem>>, %arg1: memref<16x128xf32, #tpu.memory_space<vmem>>, %arg2: memref<1x128xf32, #tpu.memory_space<vmem>>, %arg3: memref<16x128xf32, #tpu.memory_space<vmem>>) attributes {dimension_semantics = [], scalar_prefetch = 0 : i64, scratch_operands = 0 : i64, tpu.core_type = #tpu.core_type<tc>} {
    %c0 = arith.constant 0 : index
    %c0_0 = arith.constant 0 : index
    %0 = vector.load %arg0[%c0, %c0_0] : memref<16x16xf32, #tpu.memory_space<vmem>>, vector<16x16xf32>
    %c0_1 = arith.constant 0 : index
    %c0_2 = arith.constant 0 : index
    %1 = vector.load %arg1[%c0_1, %c0_2] : memref<16x128xf32, #tpu.memory_space<vmem>>, vector<16x128xf32>
    %cst = arith.constant dense<0.000000e+00> : vector<16x128xf32>
    %2 = tpu.matmul %0, %1, %cst {dimension_numbers = #tpu.dot_dimension_numbers<[1], [0], [0], [1], [0, 0, 1, 1], [], []>} : vector<16x16xf32>, vector<16x128xf32>, vector<16x128xf32> -> vector<16x128xf32>
    %c0_3 = arith.constant 0 : index
    %c0_4 = arith.constant 0 : index
    %3 = vector.load %arg2[%c0_3, %c0_4] : memref<1x128xf32, #tpu.memory_space<vmem>>, vector<1x128xf32>
    %4 = vector.broadcast %3 : vector<1x128xf32> to vector<16x128xf32>
    %5 = arith.addf %2, %4 : vector<16x128xf32>
    %c0_5 = arith.constant 0 : index
    %c0_6 = arith.constant 0 : index
    %6 = vector.load %arg3[%c0_5, %c0_6] : memref<16x128xf32, #tpu.memory_space<vmem>>, vector<16x128xf32>
    tpu.vector_store %arg3[%c0_5, %c0_6], %5 {strides = array<i32>} : memref<16x128xf32, #tpu.memory_space<vmem>>, vector<16x128xf32>,
    return
  }
}

module attributes {stable_mosaic.version = 11 : i64} {
  func.func @_lstm_fc_kernel(%arg0: i32, %arg1: memref<8x2x128xf32, #tpu.memory_space<vmem>>, %arg2: memref<32x128xf32, #tpu.memory_space<vmem>>, %arg3: memref<32x4xf32, #tpu.memory_space<vmem>>, %arg4: memref<1x4xf32, #tpu.memory_space<vmem>>, %arg5: memref<2x4xf32, #tpu.memory_space<vmem>>, %arg6: memref<2x32xf32, #tpu.memory_space<vmem>>, %arg7: memref<2x32xf32, #tpu.memory_space<vmem>>) attributes {dimension_semantics = [#tpu.dimension_semantics<arbitrary>], iteration_bounds = array<i64: 1>, scalar_prefetch = 0 : i64, scratch_operands = 2 : i64, tpu.core_type = #tpu.core_type<tc>, window_params = [{transform_indices = @transform_0, window_bounds = array<i64: 8, 2, 128>}, {pipeline_mode = #tpu.pipeline_mode<synchronous>, transform_indices = @transform_1, window_bounds = array<i64: 32, 128>}, {pipeline_mode = #tpu.pipeline_mode<synchronous>, transform_indices = @transform_2, window_bounds = array<i64: 32, 4>}, {pipeline_mode = #tpu.pipeline_mode<synchronous>, transform_indices = @transform_3, window_bounds = array<i64: 1, 4>}, {pipeline_mode = #tpu.pipeline_mode<synchronous>, transform_indices = @transform_4, window_bounds = array<i64: 2, 4>}]} {
    %c0_i32 = arith.constant 0 : i32
    %0 = arith.cmpi eq, %arg0, %c0_i32 : i32
    %1 = arith.extui %0 : i1 to i32
    %c0_i32_0 = arith.constant 0 : i32
    %2 = arith.cmpi ne, %1, %c0_i32_0 : i32
    scf.if %2 {
      %cst_60 = arith.constant 0.000000e+00 : f32
      %251 = vector.broadcast %cst_60 : f32 to vector<2x32xf32>
      %c0_61 = arith.constant 0 : index
      %c0_62 = arith.constant 0 : index
      %252 = vector.load %arg6[%c0_61, %c0_62] : memref<2x32xf32, #tpu.memory_space<vmem>>, vector<2x32xf32>
      tpu.vector_store %arg6[%c0_61, %c0_62], %251 {strides = array<i32>} : memref<2x32xf32, #tpu.memory_space<vmem>>, vector<2x32xf32>,
      %cst_63 = arith.constant 0.000000e+00 : f32
      %253 = vector.broadcast %cst_63 : f32 to vector<2x32xf32>
      %c0_64 = arith.constant 0 : index
      %c0_65 = arith.constant 0 : index
      %254 = vector.load %arg7[%c0_64, %c0_65] : memref<2x32xf32, #tpu.memory_space<vmem>>, vector<2x32xf32>
      tpu.vector_store %arg7[%c0_64, %c0_65], %253 {strides = array<i32>} : memref<2x32xf32, #tpu.memory_space<vmem>>, vector<2x32xf32>,
    } else {
    }
    %c0 = arith.constant 0 : index
    %c0_1 = arith.constant 0 : index
    %3 = vector.load %arg2[%c0, %c0_1] : memref<32x128xf32, #tpu.memory_space<vmem>>, vector<32x128xf32>
    %c0_2 = arith.constant 0 : index
    %c0_3 = arith.constant 0 : index
    %4 = vector.load %arg6[%c0_2, %c0_3] : memref<2x32xf32, #tpu.memory_space<vmem>>, vector<2x32xf32>
    %c0_4 = arith.constant 0 : index
    %c0_5 = arith.constant 0 : index
    %5 = vector.load %arg7[%c0_4, %c0_5] : memref<2x32xf32, #tpu.memory_space<vmem>>, vector<2x32xf32>
    %c0_i32_6 = arith.constant 0 : i32
    %6 = arith.index_cast %c0_i32_6 : i32 to index
    %c0_7 = arith.constant 0 : index
    %c0_8 = arith.constant 0 : index
    %7 = vector.load %arg1[%6, %c0_7, %c0_8] : memref<8x2x128xf32, #tpu.memory_space<vmem>>, vector<1x2x128xf32>
    %8 = vector.shape_cast %7 : vector<1x2x128xf32> to vector<2x128xf32>
    %cst = arith.constant dense<0.000000e+00> : vector<2x128xf32>
    %9 = tpu.matmul %4, %3, %cst {dimension_numbers = #tpu.dot_dimension_numbers<[1], [0], [0], [1], [0, 0, 1, 1], [], []>} : vector<2x32xf32>, vector<32x128xf32>, vector<2x128xf32> -> vector<2x128xf32>
    %10 = arith.addf %8, %9 : vector<2x128xf32>
    %11 = vector.extract_strided_slice %10 {offsets = [0, 0], sizes = [2, 32], strides = [1, 1]} : vector<2x128xf32> to vector<2x32xf32>
    %12 = arith.negf %11 : vector<2x32xf32>
    %13 = math.exp %12 : vector<2x32xf32>
    %cst_9 = arith.constant 1.000000e+00 : f32
    %14 = vector.broadcast %cst_9 : f32 to vector<2x32xf32>
    %15 = arith.addf %14, %13 : vector<2x32xf32>
    %16 = arith.divf %14, %15 : vector<2x32xf32>
    %17 = vector.extract_strided_slice %10 {offsets = [0, 32], sizes = [2, 32], strides = [1, 1]} : vector<2x128xf32> to vector<2x32xf32>
    %18 = arith.negf %17 : vector<2x32xf32>
    %19 = math.exp %18 : vector<2x32xf32>
    %cst_10 = arith.constant 1.000000e+00 : f32
    %20 = vector.broadcast %cst_10 : f32 to vector<2x32xf32>
    %21 = arith.addf %20, %19 : vector<2x32xf32>
    %22 = arith.divf %20, %21 : vector<2x32xf32>
    %23 = vector.extract_strided_slice %10 {offsets = [0, 64], sizes = [2, 32], strides = [1, 1]} : vector<2x128xf32> to vector<2x32xf32>
    %24 = math.tanh %23 : vector<2x32xf32>
    %25 = vector.extract_strided_slice %10 {offsets = [0, 96], sizes = [2, 32], strides = [1, 1]} : vector<2x128xf32> to vector<2x32xf32>
    %26 = arith.negf %25 : vector<2x32xf32>
    %27 = math.exp %26 : vector<2x32xf32>
    %cst_11 = arith.constant 1.000000e+00 : f32
    %28 = vector.broadcast %cst_11 : f32 to vector<2x32xf32>
    %29 = arith.addf %28, %27 : vector<2x32xf32>
    %30 = arith.divf %28, %29 : vector<2x32xf32>
    %31 = arith.mulf %22, %5 : vector<2x32xf32>
    %32 = arith.mulf %16, %24 : vector<2x32xf32>
    %33 = arith.addf %31, %32 : vector<2x32xf32>
    %34 = math.tanh %33 : vector<2x32xf32>
    %35 = arith.mulf %30, %34 : vector<2x32xf32>
    %c1_i32 = arith.constant 1 : i32
    %36 = arith.index_cast %c1_i32 : i32 to index
    %c0_12 = arith.constant 0 : index
    %c0_13 = arith.constant 0 : index
    %37 = vector.load %arg1[%36, %c0_12, %c0_13] : memref<8x2x128xf32, #tpu.memory_space<vmem>>, vector<1x2x128xf32>
    %38 = vector.shape_cast %37 : vector<1x2x128xf32> to vector<2x128xf32>
    %cst_14 = arith.constant dense<0.000000e+00> : vector<2x128xf32>
    %39 = tpu.matmul %35, %3, %cst_14 {dimension_numbers = #tpu.dot_dimension_numbers<[1], [0], [0], [1], [0, 0, 1, 1], [], []>} : vector<2x32xf32>, vector<32x128xf32>, vector<2x128xf32> -> vector<2x128xf32>
    %40 = arith.addf %38, %39 : vector<2x128xf32>
    %41 = vector.extract_strided_slice %40 {offsets = [0, 0], sizes = [2, 32], strides = [1, 1]} : vector<2x128xf32> to vector<2x32xf32>
    %42 = arith.negf %41 : vector<2x32xf32>
    %43 = math.exp %42 : vector<2x32xf32>
    %cst_15 = arith.constant 1.000000e+00 : f32
    %44 = vector.broadcast %cst_15 : f32 to vector<2x32xf32>
    %45 = arith.addf %44, %43 : vector<2x32xf32>
    %46 = arith.divf %44, %45 : vector<2x32xf32>
    %47 = vector.extract_strided_slice %40 {offsets = [0, 32], sizes = [2, 32], strides = [1, 1]} : vector<2x128xf32> to vector<2x32xf32>
    %48 = arith.negf %47 : vector<2x32xf32>
    %49 = math.exp %48 : vector<2x32xf32>
    %cst_16 = arith.constant 1.000000e+00 : f32
    %50 = vector.broadcast %cst_16 : f32 to vector<2x32xf32>
    %51 = arith.addf %50, %49 : vector<2x32xf32>
    %52 = arith.divf %50, %51 : vector<2x32xf32>
    %53 = vector.extract_strided_slice %40 {offsets = [0, 64], sizes = [2, 32], strides = [1, 1]} : vector<2x128xf32> to vector<2x32xf32>
    %54 = math.tanh %53 : vector<2x32xf32>
    %55 = vector.extract_strided_slice %40 {offsets = [0, 96], sizes = [2, 32], strides = [1, 1]} : vector<2x128xf32> to vector<2x32xf32>
    %56 = arith.negf %55 : vector<2x32xf32>
    %57 = math.exp %56 : vector<2x32xf32>
    %cst_17 = arith.constant 1.000000e+00 : f32
    %58 = vector.broadcast %cst_17 : f32 to vector<2x32xf32>
    %59 = arith.addf %58, %57 : vector<2x32xf32>
    %60 = arith.divf %58, %59 : vector<2x32xf32>
    %61 = arith.mulf %52, %33 : vector<2x32xf32>
    %62 = arith.mulf %46, %54 : vector<2x32xf32>
    %63 = arith.addf %61, %62 : vector<2x32xf32>
    %64 = math.tanh %63 : vector<2x32xf32>
    %65 = arith.mulf %60, %64 : vector<2x32xf32>
    %c2_i32 = arith.constant 2 : i32
    %66 = arith.index_cast %c2_i32 : i32 to index
    %c0_18 = arith.constant 0 : index
    %c0_19 = arith.constant 0 : index
    %67 = vector.load %arg1[%66, %c0_18, %c0_19] : memref<8x2x128xf32, #tpu.memory_space<vmem>>, vector<1x2x128xf32>
    %68 = vector.shape_cast %67 : vector<1x2x128xf32> to vector<2x128xf32>
    %cst_20 = arith.constant dense<0.000000e+00> : vector<2x128xf32>
    %69 = tpu.matmul %65, %3, %cst_20 {dimension_numbers = #tpu.dot_dimension_numbers<[1], [0], [0], [1], [0, 0, 1, 1], [], []>} : vector<2x32xf32>, vector<32x128xf32>, vector<2x128xf32> -> vector<2x128xf32>
    %70 = arith.addf %68, %69 : vector<2x128xf32>
    %71 = vector.extract_strided_slice %70 {offsets = [0, 0], sizes = [2, 32], strides = [1, 1]} : vector<2x128xf32> to vector<2x32xf32>
    %72 = arith.negf %71 : vector<2x32xf32>
    %73 = math.exp %72 : vector<2x32xf32>
    %cst_21 = arith.constant 1.000000e+00 : f32
    %74 = vector.broadcast %cst_21 : f32 to vector<2x32xf32>
    %75 = arith.addf %74, %73 : vector<2x32xf32>
    %76 = arith.divf %74, %75 : vector<2x32xf32>
    %77 = vector.extract_strided_slice %70 {offsets = [0, 32], sizes = [2, 32], strides = [1, 1]} : vector<2x128xf32> to vector<2x32xf32>
    %78 = arith.negf %77 : vector<2x32xf32>
    %79 = math.exp %78 : vector<2x32xf32>
    %cst_22 = arith.constant 1.000000e+00 : f32
    %80 = vector.broadcast %cst_22 : f32 to vector<2x32xf32>
    %81 = arith.addf %80, %79 : vector<2x32xf32>
    %82 = arith.divf %80, %81 : vector<2x32xf32>
    %83 = vector.extract_strided_slice %70 {offsets = [0, 64], sizes = [2, 32], strides = [1, 1]} : vector<2x128xf32> to vector<2x32xf32>
    %84 = math.tanh %83 : vector<2x32xf32>
    %85 = vector.extract_strided_slice %70 {offsets = [0, 96], sizes = [2, 32], strides = [1, 1]} : vector<2x128xf32> to vector<2x32xf32>
    %86 = arith.negf %85 : vector<2x32xf32>
    %87 = math.exp %86 : vector<2x32xf32>
    %cst_23 = arith.constant 1.000000e+00 : f32
    %88 = vector.broadcast %cst_23 : f32 to vector<2x32xf32>
    %89 = arith.addf %88, %87 : vector<2x32xf32>
    %90 = arith.divf %88, %89 : vector<2x32xf32>
    %91 = arith.mulf %82, %63 : vector<2x32xf32>
    %92 = arith.mulf %76, %84 : vector<2x32xf32>
    %93 = arith.addf %91, %92 : vector<2x32xf32>
    %94 = math.tanh %93 : vector<2x32xf32>
    %95 = arith.mulf %90, %94 : vector<2x32xf32>
    %c3_i32 = arith.constant 3 : i32
    %96 = arith.index_cast %c3_i32 : i32 to index
    %c0_24 = arith.constant 0 : index
    %c0_25 = arith.constant 0 : index
    %97 = vector.load %arg1[%96, %c0_24, %c0_25] : memref<8x2x128xf32, #tpu.memory_space<vmem>>, vector<1x2x128xf32>
    %98 = vector.shape_cast %97 : vector<1x2x128xf32> to vector<2x128xf32>
    %cst_26 = arith.constant dense<0.000000e+00> : vector<2x128xf32>
    %99 = tpu.matmul %95, %3, %cst_26 {dimension_numbers = #tpu.dot_dimension_numbers<[1], [0], [0], [1], [0, 0, 1, 1], [], []>} : vector<2x32xf32>, vector<32x128xf32>, vector<2x128xf32> -> vector<2x128xf32>
    %100 = arith.addf %98, %99 : vector<2x128xf32>
    %101 = vector.extract_strided_slice %100 {offsets = [0, 0], sizes = [2, 32], strides = [1, 1]} : vector<2x128xf32> to vector<2x32xf32>
    %102 = arith.negf %101 : vector<2x32xf32>
    %103 = math.exp %102 : vector<2x32xf32>
    %cst_27 = arith.constant 1.000000e+00 : f32
    %104 = vector.broadcast %cst_27 : f32 to vector<2x32xf32>
    %105 = arith.addf %104, %103 : vector<2x32xf32>
    %106 = arith.divf %104, %105 : vector<2x32xf32>
    %107 = vector.extract_strided_slice %100 {offsets = [0, 32], sizes = [2, 32], strides = [1, 1]} : vector<2x128xf32> to vector<2x32xf32>
    %108 = arith.negf %107 : vector<2x32xf32>
    %109 = math.exp %108 : vector<2x32xf32>
    %cst_28 = arith.constant 1.000000e+00 : f32
    %110 = vector.broadcast %cst_28 : f32 to vector<2x32xf32>
    %111 = arith.addf %110, %109 : vector<2x32xf32>
    %112 = arith.divf %110, %111 : vector<2x32xf32>
    %113 = vector.extract_strided_slice %100 {offsets = [0, 64], sizes = [2, 32], strides = [1, 1]} : vector<2x128xf32> to vector<2x32xf32>
    %114 = math.tanh %113 : vector<2x32xf32>
    %115 = vector.extract_strided_slice %100 {offsets = [0, 96], sizes = [2, 32], strides = [1, 1]} : vector<2x128xf32> to vector<2x32xf32>
    %116 = arith.negf %115 : vector<2x32xf32>
    %117 = math.exp %116 : vector<2x32xf32>
    %cst_29 = arith.constant 1.000000e+00 : f32
    %118 = vector.broadcast %cst_29 : f32 to vector<2x32xf32>
    %119 = arith.addf %118, %117 : vector<2x32xf32>
    %120 = arith.divf %118, %119 : vector<2x32xf32>
    %121 = arith.mulf %112, %93 : vector<2x32xf32>
    %122 = arith.mulf %106, %114 : vector<2x32xf32>
    %123 = arith.addf %121, %122 : vector<2x32xf32>
    %124 = math.tanh %123 : vector<2x32xf32>
    %125 = arith.mulf %120, %124 : vector<2x32xf32>
    %c4_i32 = arith.constant 4 : i32
    %126 = arith.index_cast %c4_i32 : i32 to index
    %c0_30 = arith.constant 0 : index
    %c0_31 = arith.constant 0 : index
    %127 = vector.load %arg1[%126, %c0_30, %c0_31] : memref<8x2x128xf32, #tpu.memory_space<vmem>>, vector<1x2x128xf32>
    %128 = vector.shape_cast %127 : vector<1x2x128xf32> to vector<2x128xf32>
    %cst_32 = arith.constant dense<0.000000e+00> : vector<2x128xf32>
    %129 = tpu.matmul %125, %3, %cst_32 {dimension_numbers = #tpu.dot_dimension_numbers<[1], [0], [0], [1], [0, 0, 1, 1], [], []>} : vector<2x32xf32>, vector<32x128xf32>, vector<2x128xf32> -> vector<2x128xf32>
    %130 = arith.addf %128, %129 : vector<2x128xf32>
    %131 = vector.extract_strided_slice %130 {offsets = [0, 0], sizes = [2, 32], strides = [1, 1]} : vector<2x128xf32> to vector<2x32xf32>
    %132 = arith.negf %131 : vector<2x32xf32>
    %133 = math.exp %132 : vector<2x32xf32>
    %cst_33 = arith.constant 1.000000e+00 : f32
    %134 = vector.broadcast %cst_33 : f32 to vector<2x32xf32>
    %135 = arith.addf %134, %133 : vector<2x32xf32>
    %136 = arith.divf %134, %135 : vector<2x32xf32>
    %137 = vector.extract_strided_slice %130 {offsets = [0, 32], sizes = [2, 32], strides = [1, 1]} : vector<2x128xf32> to vector<2x32xf32>
    %138 = arith.negf %137 : vector<2x32xf32>
    %139 = math.exp %138 : vector<2x32xf32>
    %cst_34 = arith.constant 1.000000e+00 : f32
    %140 = vector.broadcast %cst_34 : f32 to vector<2x32xf32>
    %141 = arith.addf %140, %139 : vector<2x32xf32>
    %142 = arith.divf %140, %141 : vector<2x32xf32>
    %143 = vector.extract_strided_slice %130 {offsets = [0, 64], sizes = [2, 32], strides = [1, 1]} : vector<2x128xf32> to vector<2x32xf32>
    %144 = math.tanh %143 : vector<2x32xf32>
    %145 = vector.extract_strided_slice %130 {offsets = [0, 96], sizes = [2, 32], strides = [1, 1]} : vector<2x128xf32> to vector<2x32xf32>
    %146 = arith.negf %145 : vector<2x32xf32>
    %147 = math.exp %146 : vector<2x32xf32>
    %cst_35 = arith.constant 1.000000e+00 : f32
    %148 = vector.broadcast %cst_35 : f32 to vector<2x32xf32>
    %149 = arith.addf %148, %147 : vector<2x32xf32>
    %150 = arith.divf %148, %149 : vector<2x32xf32>
    %151 = arith.mulf %142, %123 : vector<2x32xf32>
    %152 = arith.mulf %136, %144 : vector<2x32xf32>
    %153 = arith.addf %151, %152 : vector<2x32xf32>
    %154 = math.tanh %153 : vector<2x32xf32>
    %155 = arith.mulf %150, %154 : vector<2x32xf32>
    %c5_i32 = arith.constant 5 : i32
    %156 = arith.index_cast %c5_i32 : i32 to index
    %c0_36 = arith.constant 0 : index
    %c0_37 = arith.constant 0 : index
    %157 = vector.load %arg1[%156, %c0_36, %c0_37] : memref<8x2x128xf32, #tpu.memory_space<vmem>>, vector<1x2x128xf32>
    %158 = vector.shape_cast %157 : vector<1x2x128xf32> to vector<2x128xf32>
    %cst_38 = arith.constant dense<0.000000e+00> : vector<2x128xf32>
    %159 = tpu.matmul %155, %3, %cst_38 {dimension_numbers = #tpu.dot_dimension_numbers<[1], [0], [0], [1], [0, 0, 1, 1], [], []>} : vector<2x32xf32>, vector<32x128xf32>, vector<2x128xf32> -> vector<2x128xf32>
    %160 = arith.addf %158, %159 : vector<2x128xf32>
    %161 = vector.extract_strided_slice %160 {offsets = [0, 0], sizes = [2, 32], strides = [1, 1]} : vector<2x128xf32> to vector<2x32xf32>
    %162 = arith.negf %161 : vector<2x32xf32>
    %163 = math.exp %162 : vector<2x32xf32>
    %cst_39 = arith.constant 1.000000e+00 : f32
    %164 = vector.broadcast %cst_39 : f32 to vector<2x32xf32>
    %165 = arith.addf %164, %163 : vector<2x32xf32>
    %166 = arith.divf %164, %165 : vector<2x32xf32>
    %167 = vector.extract_strided_slice %160 {offsets = [0, 32], sizes = [2, 32], strides = [1, 1]} : vector<2x128xf32> to vector<2x32xf32>
    %168 = arith.negf %167 : vector<2x32xf32>
    %169 = math.exp %168 : vector<2x32xf32>
    %cst_40 = arith.constant 1.000000e+00 : f32
    %170 = vector.broadcast %cst_40 : f32 to vector<2x32xf32>
    %171 = arith.addf %170, %169 : vector<2x32xf32>
    %172 = arith.divf %170, %171 : vector<2x32xf32>
    %173 = vector.extract_strided_slice %160 {offsets = [0, 64], sizes = [2, 32], strides = [1, 1]} : vector<2x128xf32> to vector<2x32xf32>
    %174 = math.tanh %173 : vector<2x32xf32>
    %175 = vector.extract_strided_slice %160 {offsets = [0, 96], sizes = [2, 32], strides = [1, 1]} : vector<2x128xf32> to vector<2x32xf32>
    %176 = arith.negf %175 : vector<2x32xf32>
    %177 = math.exp %176 : vector<2x32xf32>
    %cst_41 = arith.constant 1.000000e+00 : f32
    %178 = vector.broadcast %cst_41 : f32 to vector<2x32xf32>
    %179 = arith.addf %178, %177 : vector<2x32xf32>
    %180 = arith.divf %178, %179 : vector<2x32xf32>
    %181 = arith.mulf %172, %153 : vector<2x32xf32>
    %182 = arith.mulf %166, %174 : vector<2x32xf32>
    %183 = arith.addf %181, %182 : vector<2x32xf32>
    %184 = math.tanh %183 : vector<2x32xf32>
    %185 = arith.mulf %180, %184 : vector<2x32xf32>
    %c6_i32 = arith.constant 6 : i32
    %186 = arith.index_cast %c6_i32 : i32 to index
    %c0_42 = arith.constant 0 : index
    %c0_43 = arith.constant 0 : index
    %187 = vector.load %arg1[%186, %c0_42, %c0_43] : memref<8x2x128xf32, #tpu.memory_space<vmem>>, vector<1x2x128xf32>
    %188 = vector.shape_cast %187 : vector<1x2x128xf32> to vector<2x128xf32>
    %cst_44 = arith.constant dense<0.000000e+00> : vector<2x128xf32>
    %189 = tpu.matmul %185, %3, %cst_44 {dimension_numbers = #tpu.dot_dimension_numbers<[1], [0], [0], [1], [0, 0, 1, 1], [], []>} : vector<2x32xf32>, vector<32x128xf32>, vector<2x128xf32> -> vector<2x128xf32>
    %190 = arith.addf %188, %189 : vector<2x128xf32>
    %191 = vector.extract_strided_slice %190 {offsets = [0, 0], sizes = [2, 32], strides = [1, 1]} : vector<2x128xf32> to vector<2x32xf32>
    %192 = arith.negf %191 : vector<2x32xf32>
    %193 = math.exp %192 : vector<2x32xf32>
    %cst_45 = arith.constant 1.000000e+00 : f32
    %194 = vector.broadcast %cst_45 : f32 to vector<2x32xf32>
    %195 = arith.addf %194, %193 : vector<2x32xf32>
    %196 = arith.divf %194, %195 : vector<2x32xf32>
    %197 = vector.extract_strided_slice %190 {offsets = [0, 32], sizes = [2, 32], strides = [1, 1]} : vector<2x128xf32> to vector<2x32xf32>
    %198 = arith.negf %197 : vector<2x32xf32>
    %199 = math.exp %198 : vector<2x32xf32>
    %cst_46 = arith.constant 1.000000e+00 : f32
    %200 = vector.broadcast %cst_46 : f32 to vector<2x32xf32>
    %201 = arith.addf %200, %199 : vector<2x32xf32>
    %202 = arith.divf %200, %201 : vector<2x32xf32>
    %203 = vector.extract_strided_slice %190 {offsets = [0, 64], sizes = [2, 32], strides = [1, 1]} : vector<2x128xf32> to vector<2x32xf32>
    %204 = math.tanh %203 : vector<2x32xf32>
    %205 = vector.extract_strided_slice %190 {offsets = [0, 96], sizes = [2, 32], strides = [1, 1]} : vector<2x128xf32> to vector<2x32xf32>
    %206 = arith.negf %205 : vector<2x32xf32>
    %207 = math.exp %206 : vector<2x32xf32>
    %cst_47 = arith.constant 1.000000e+00 : f32
    %208 = vector.broadcast %cst_47 : f32 to vector<2x32xf32>
    %209 = arith.addf %208, %207 : vector<2x32xf32>
    %210 = arith.divf %208, %209 : vector<2x32xf32>
    %211 = arith.mulf %202, %183 : vector<2x32xf32>
    %212 = arith.mulf %196, %204 : vector<2x32xf32>
    %213 = arith.addf %211, %212 : vector<2x32xf32>
    %214 = math.tanh %213 : vector<2x32xf32>
    %215 = arith.mulf %210, %214 : vector<2x32xf32>
    %c7_i32 = arith.constant 7 : i32
    %216 = arith.index_cast %c7_i32 : i32 to index
    %c0_48 = arith.constant 0 : index
    %c0_49 = arith.constant 0 : index
    %217 = vector.load %arg1[%216, %c0_48, %c0_49] : memref<8x2x128xf32, #tpu.memory_space<vmem>>, vector<1x2x128xf32>
    %218 = vector.shape_cast %217 : vector<1x2x128xf32> to vector<2x128xf32>
    %cst_50 = arith.constant dense<0.000000e+00> : vector<2x128xf32>
    %219 = tpu.matmul %215, %3, %cst_50 {dimension_numbers = #tpu.dot_dimension_numbers<[1], [0], [0], [1], [0, 0, 1, 1], [], []>} : vector<2x32xf32>, vector<32x128xf32>, vector<2x128xf32> -> vector<2x128xf32>
    %220 = arith.addf %218, %219 : vector<2x128xf32>
    %221 = vector.extract_strided_slice %220 {offsets = [0, 0], sizes = [2, 32], strides = [1, 1]} : vector<2x128xf32> to vector<2x32xf32>
    %222 = arith.negf %221 : vector<2x32xf32>
    %223 = math.exp %222 : vector<2x32xf32>
    %cst_51 = arith.constant 1.000000e+00 : f32
    %224 = vector.broadcast %cst_51 : f32 to vector<2x32xf32>
    %225 = arith.addf %224, %223 : vector<2x32xf32>
    %226 = arith.divf %224, %225 : vector<2x32xf32>
    %227 = vector.extract_strided_slice %220 {offsets = [0, 32], sizes = [2, 32], strides = [1, 1]} : vector<2x128xf32> to vector<2x32xf32>
    %228 = arith.negf %227 : vector<2x32xf32>
    %229 = math.exp %228 : vector<2x32xf32>
    %cst_52 = arith.constant 1.000000e+00 : f32
    %230 = vector.broadcast %cst_52 : f32 to vector<2x32xf32>
    %231 = arith.addf %230, %229 : vector<2x32xf32>
    %232 = arith.divf %230, %231 : vector<2x32xf32>
    %233 = vector.extract_strided_slice %220 {offsets = [0, 64], sizes = [2, 32], strides = [1, 1]} : vector<2x128xf32> to vector<2x32xf32>
    %234 = math.tanh %233 : vector<2x32xf32>
    %235 = vector.extract_strided_slice %220 {offsets = [0, 96], sizes = [2, 32], strides = [1, 1]} : vector<2x128xf32> to vector<2x32xf32>
    %236 = arith.negf %235 : vector<2x32xf32>
    %237 = math.exp %236 : vector<2x32xf32>
    %cst_53 = arith.constant 1.000000e+00 : f32
    %238 = vector.broadcast %cst_53 : f32 to vector<2x32xf32>
    %239 = arith.addf %238, %237 : vector<2x32xf32>
    %240 = arith.divf %238, %239 : vector<2x32xf32>
    %241 = arith.mulf %232, %213 : vector<2x32xf32>
    %242 = arith.mulf %226, %234 : vector<2x32xf32>
    %243 = arith.addf %241, %242 : vector<2x32xf32>
    %244 = math.tanh %243 : vector<2x32xf32>
    %245 = arith.mulf %240, %244 : vector<2x32xf32>
    %c8_i32 = arith.constant 8 : i32
    %c0_54 = arith.constant 0 : index
    %c0_55 = arith.constant 0 : index
    %246 = vector.load %arg6[%c0_54, %c0_55] : memref<2x32xf32, #tpu.memory_space<vmem>>, vector<2x32xf32>
    tpu.vector_store %arg6[%c0_54, %c0_55], %245 {strides = array<i32>} : memref<2x32xf32, #tpu.memory_space<vmem>>, vector<2x32xf32>,
    %c0_56 = arith.constant 0 : index
    %c0_57 = arith.constant 0 : index
    %247 = vector.load %arg7[%c0_56, %c0_57] : memref<2x32xf32, #tpu.memory_space<vmem>>, vector<2x32xf32>
    tpu.vector_store %arg7[%c0_56, %c0_57], %243 {strides = array<i32>} : memref<2x32xf32, #tpu.memory_space<vmem>>, vector<2x32xf32>,
    %c0_i32_58 = arith.constant 0 : i32
    %248 = arith.cmpi eq, %arg0, %c0_i32_58 : i32
    %249 = arith.extui %248 : i1 to i32
    %c0_i32_59 = arith.constant 0 : i32
    %250 = arith.cmpi ne, %249, %c0_i32_59 : i32
    scf.if %250 {
      %c0_60 = arith.constant 0 : index
      %c0_61 = arith.constant 0 : index
      %251 = vector.load %arg3[%c0_60, %c0_61] : memref<32x4xf32, #tpu.memory_space<vmem>>, vector<32x4xf32>
      %cst_62 = arith.constant dense<0.000000e+00> : vector<2x4xf32>
      %252 = tpu.matmul %245, %251, %cst_62 {dimension_numbers = #tpu.dot_dimension_numbers<[1], [0], [0], [1], [0, 0, 1, 1], [], []>} : vector<2x32xf32>, vector<32x4xf32>, vector<2x4xf32> -> vector<2x4xf32>
      %c0_63 = arith.constant 0 : index
      %c0_64 = arith.constant 0 : index
      %253 = vector.load %arg4[%c0_63, %c0_64] : memref<1x4xf32, #tpu.memory_space<vmem>>, vector<1x4xf32>
      %254 = vector.broadcast %253 : vector<1x4xf32> to vector<2x4xf32>
      %255 = arith.addf %252, %254 : vector<2x4xf32>
      %c0_65 = arith.constant 0 : index
      %c0_66 = arith.constant 0 : index
      %256 = vector.load %arg5[%c0_65, %c0_66] : memref<2x4xf32, #tpu.memory_space<vmem>>, vector<2x4xf32>
      tpu.vector_store %arg5[%c0_65, %c0_66], %255 {strides = array<i32>} : memref<2x4xf32, #tpu.memory_space<vmem>>, vector<2x4xf32>,
    } else {
    }
    return
  }
  func.func @transform_0(%arg0: i32) -> (i32, i32, i32) {
    %c0_i32 = arith.constant 0 : i32
    %c0_i32_0 = arith.constant 0 : i32
    %c0_i32_1 = arith.constant 0 : i32
    return %arg0, %c0_i32, %c0_i32_0 : i32, i32, i32
  }
  func.func @transform_1(%arg0: i32) -> (i32, i32) {
    %c0_i32 = arith.constant 0 : i32
    %c0_i32_0 = arith.constant 0 : i32
    %c0_i32_1 = arith.constant 0 : i32
    return %c0_i32, %c0_i32_0 : i32, i32
  }
  func.func @transform_2(%arg0: i32) -> (i32, i32) {
    %c0_i32 = arith.constant 0 : i32
    %c0_i32_0 = arith.constant 0 : i32
    %c0_i32_1 = arith.constant 0 : i32
    return %c0_i32, %c0_i32_0 : i32, i32
  }
  func.func @transform_3(%arg0: i32) -> (i32, i32) {
    %c0_i32 = arith.constant 0 : i32
    %c0_i32_0 = arith.constant 0 : i32
    %c0_i32_1 = arith.constant 0 : i32
    return %c0_i32, %c0_i32_0 : i32, i32
  }
  func.func @transform_4(%arg0: i32) -> (i32, i32) {
    %c0_i32 = arith.constant 0 : i32
    %c0_i32_0 = arith.constant 0 : i32
    %c0_i32_1 = arith.constant 0 : i32
    return %c0_i32, %c0_i32_0 : i32, i32
  }
}

</mosaic_0001>

<llo_original>
// kernel: network_single_lstm_forward.2
$region0: #{network_single_lstm_forward.2}
  #allocation0 [shape = 'u32[]', space=smem, size = 0x4, offset = 0x4, fixed_abs, tag = 'smem constant byte address 0x4 - core index']
  #allocation1 [shape = 'u32[72,128]{1,0:T(1,128)}', space=vmem, size = 0x9000, scoped, tag = 'internal scratch']
  %s0 = inlined_call_operand.vmem [shape: f32[16,16], index: 0, kind: input, shape index: {}]
  %s1 = inlined_call_operand.vmem [shape: f32[16,128], index: 1, kind: input, shape index: {}]
  %s2 = inlined_call_operand.vmem [shape: f32[1,128], index: 2, kind: input, shape index: {}]
  %s3 = inlined_call_operand.vmem [shape: f32[16,128], index: 3, kind: output, shape index: {}]
  %s4 = sld [smem:[#allocation0]]
  $region22: #{network_single_lstm_forward.2} parent=0
    _
  %s6 = ssub.s32 1, %s4
  %s7 = scalar_select 0, %s6, %s4
  // Predicated region
  $region2: #{network_single_lstm_forward.2} parent=0 // pred_check
    _
  $region3: #{network_single_lstm_forward.2} parent=0 // pred_check_branch
    %9 = sbr.rel (0) target = $region5
  $region4: #{network_single_lstm_forward.2} parent=0 // pred_region
    _
  $region5: #{network_single_lstm_forward.2} parent=0 // pred_fallthru
    _
  // Predicated region
  $region6: #{network_single_lstm_forward.2} parent=0 // pred_check
    _
  $region7: #{network_single_lstm_forward.2} parent=0 // pred_check_branch
    %11 = sbr.rel (0) target = $region9
  $region8: #{network_single_lstm_forward.2} parent=0 // pred_region
    _
  $region9: #{network_single_lstm_forward.2} parent=0 // pred_fallthru
    _
  // Predicated region
  $region10: #{network_single_lstm_forward.2} parent=0 // pred_check
    _
  $region11: #{network_single_lstm_forward.2} parent=0 // pred_check_branch
    %13 = sbr.rel (0) target = $region13
  $region12: #{network_single_lstm_forward.2} parent=0 // pred_region
    _
  $region13: #{network_single_lstm_forward.2} parent=0 // pred_fallthru
    _
  %v14 = vld [vmem:[%s0] sm:$0xff]
  %v15 = vld [vmem:[%s0 + $0x8] sm:$0xff]
  %v16 = vld [vmem:[%s1] sm:$0xff]
  %v17 = vld [vmem:[%s1 + $0x8] sm:$0xff]
  %v18 = vld [vmem:[%s2] sm:$0x1]
  %v20 = vperm.slane %v18, 0
  %vm22 = vcmask 130048
  %v24 = vsel %vm22, %v14, 0
  %v27 = vsel %vm22, %v15, 0
  %29 = vmatpush.msra.mxu0 0.0
  %30 = vmatpush.msra.mxu0 0.0
  %31 = vmatpush.msra.mxu0 0.0
  %32 = vmatpush.msra.mxu0 0.0
  %33 = vmatpush.msra.mxu0 0.0
  %34 = vmatpush.msra.mxu0 0.0
  %35 = vmatpush.msra.mxu0 0.0
  %36 = vmatpush.msra.mxu0 0.0
  %37 = vmatpush.msra.mxu0 0.0
  %38 = vmatpush.msra.mxu0 0.0
  %39 = vmatpush.msra.mxu0 0.0
  %40 = vmatpush.msra.mxu0 0.0
  %41 = vmatpush.msra.mxu0 0.0
  %42 = vmatpush.msra.mxu0 0.0
  %43 = vmatpush.msra.mxu0 %v17
  %44 = vmatpush.msra.mxu0 %v16
  %45 = vmatmul.f32.gmra.mxu0 %v24
  %v46 = vpop.f32.mrf.mxu0
  %v47 = vadd.f32 %v20, %v46
  %48 = vmatmul.f32.gmra.mxu0 %v27
  %v49 = vpop.f32.mrf.mxu0
  %v50 = vadd.f32 %v20, %v49
  %51 = vdwg.mxu0
  %52 = vst [vmem:[%s3] sm:$0xff] %v47
  %53 = vst [vmem:[%s3 + $0x8] sm:$0xff] %v50
  // Predicated region
  $region14: #{network_single_lstm_forward.2} parent=0 // pred_check
    _
  $region15: #{network_single_lstm_forward.2} parent=0 // pred_check_branch
    %55 = sbr.rel (0) target = $region17
  $region16: #{network_single_lstm_forward.2} parent=0 // pred_region
    _
  $region17: #{network_single_lstm_forward.2} parent=0 // pred_fallthru
    _
  // Predicated region
  $region18: #{network_single_lstm_forward.2} parent=0 // pred_check
    _
  $region19: #{network_single_lstm_forward.2} parent=0 // pred_check_branch
    %57 = sbr.rel (0) target = $region21
  $region20: #{network_single_lstm_forward.2} parent=0 // pred_region
    _
  $region21: #{network_single_lstm_forward.2} parent=0 // pred_fallthru
    _

// kernel: network_single_lstm_forward.3
$region0: #{network_single_lstm_forward.3}
  #allocation0 [shape = 'u32[]', space=smem, size = 0x4, offset = 0x4, fixed_abs, tag = 'smem constant byte address 0x4 - core index']
  #allocation1 [shape = 'u32[72,128]{1,0:T(1,128)}', space=vmem, size = 0x9000, scoped, tag = 'internal scratch']
  #allocation2 [shape = 'f32[2,32]{1,0:T(2,128)}', space=vmem, size = 0x400, scoped, tag = 'scratch operand']
  #allocation3 [shape = 'f32[2,32]{1,0:T(2,128)}', space=vmem, size = 0x400, scoped, tag = 'scratch operand']
  %s0 = inlined_call_operand.vmem [shape: f32[8,2,128], index: 0, kind: input, shape index: {}]
  %s1 = inlined_call_operand.vmem [shape: f32[32,128], index: 1, kind: input, shape index: {}]
  %s2 = inlined_call_operand.vmem [shape: f32[32,4], index: 2, kind: input, shape index: {}]
  %s3 = inlined_call_operand.vmem [shape: f32[1,4], index: 3, kind: input, shape index: {}]
  %s4 = inlined_call_operand.hbm [shape: f32[2,4], index: 4, kind: output, shape index: {}]
  %s5 = sld [smem:[#allocation0]]
  $region34: #{network_single_lstm_forward.3} parent=0
    _
  %s7 = ssub.s32 1, %s5
  %s8 = scalar_select 0, %s7, %s5
  $region1: #{network_single_lstm_forward.3} parent=0
    #allocation4 [shape = 'u8[1024]{0}', space=vmem, size = 0x400, scoped, tag = 'output window, operand 0, single buffered']
    #allocation5 [shape = 's32[1]{0}', space=sflag, size = 0x4, scoped, tag = 'scoped memory for network_single_lstm_forward.3']
    %9 = vsyncpa [#allocation5], 0
    // Predicated region
    $region2: #{network_single_lstm_forward.3} parent=1 // pred_check
      _
    $region3: #{network_single_lstm_forward.3} parent=1 // pred_check_branch
      %11 = sbr.rel (0) target = $region5
    $region4: #{network_single_lstm_forward.3} parent=1 // pred_region
      _
    $region5: #{network_single_lstm_forward.3} parent=1 // pred_fallthru
      _
    // Predicated region
    $region6: #{network_single_lstm_forward.3} parent=1 // pred_check
      _
    $region7: #{network_single_lstm_forward.3} parent=1 // pred_check_branch
      %13 = sbr.rel (0) target = $region9
    $region8: #{network_single_lstm_forward.3} parent=1 // pred_region
      _
    $region9: #{network_single_lstm_forward.3} parent=1 // pred_fallthru
      _
    // Predicated region
    $region10: #{network_single_lstm_forward.3} parent=1 // pred_check
      _
    $region11: #{network_single_lstm_forward.3} parent=1 // pred_check_branch
      %15 = sbr.rel (0) target = $region13
    $region12: #{network_single_lstm_forward.3} parent=1 // pred_region
      _
    $region13: #{network_single_lstm_forward.3} parent=1 // pred_fallthru
      _
    // Predicated region
    $region14: #{network_single_lstm_forward.3} parent=1 // pred_check
      _
    $region15: #{network_single_lstm_forward.3} parent=1 // pred_check_branch
      %17 = sbr.rel (0) target = $region17
    $region16: #{network_single_lstm_forward.3} parent=1 // pred_region
      _
    $region17: #{network_single_lstm_forward.3} parent=1 // pred_fallthru
      _
    %p18 = scmp.eq.s32.totalorder 0, 0
    // Predicated region
    $region18: #{network_single_lstm_forward.3} parent=1 // pred_check
      %p19 = pneg %p18
    $region19: #{network_single_lstm_forward.3} parent=1 // pred_check_branch
      %21 = sbr.rel (%p19) target = $region21
    $region20: #{network_single_lstm_forward.3} parent=1 // pred_region
      %vm22 = vcmask 254976
      %23 = vst.msk [vmem:[#allocation2] sm:$0x3] %vm22, 0.0
      %24 = vst.msk [vmem:[#allocation3] sm:$0x3] %vm22, 0.0
    $region21: #{network_single_lstm_forward.3} parent=1 // pred_fallthru
      _
    %v25 = vld [vmem:[%s1] sm:$0xff]
    %v26 = vld [vmem:[%s1 + $0x8] sm:$0xff]
    %v27 = vld [vmem:[%s1 + $0x10] sm:$0xff]
    %v28 = vld [vmem:[%s1 + $0x18] sm:$0xff]
    %v29 = vld [vmem:[#allocation2] sm:$0x3]
    %v30 = vld [vmem:[#allocation3] sm:$0x3]
    %v31 = vld [vmem:[%s0] sm:$0x3]
    %vm32 = vcmask 261120
    %v34 = vsel %vm32, %v29, 0
    %36 = vmatpush.msra.mxu0 0.0
    %37 = vmatpush.msra.mxu0 0.0
    %38 = vmatpush.msra.mxu0 0.0
    %39 = vmatpush.msra.mxu0 0.0
    %40 = vmatpush.msra.mxu0 0.0
    %41 = vmatpush.msra.mxu0 0.0
    %42 = vmatpush.msra.mxu0 0.0
    %43 = vmatpush.msra.mxu0 0.0
    %44 = vmatpush.msra.mxu0 0.0
    %45 = vmatpush.msra.mxu0 0.0
    %46 = vmatpush.msra.mxu0 0.0
    %47 = vmatpush.msra.mxu0 0.0
    %48 = vmatpush.msra.mxu0 %v28
    %49 = vmatpush.msra.mxu0 %v27
    %50 = vmatpush.msra.mxu0 %v26
    %51 = vmatpush.msra.mxu0 %v25
    %52 = vmatmul.f32.gmra.mxu0 %v34
    %v53 = vpop.f32.mrf.mxu0
    %v54 = vadd.f32 0.0, %v53
    %55 = vdwg.mxu0
    %v56 = vadd.f32 %v31, %v54
    %v57 = vxor.u32 %v56, 2147483648
    %v58 = vmul.f32 %v57, 1.442695
    %v59 = vpow.pop %v58
    %v60 = vadd.f32 %v59, 1.0
    %v61 = vrcp.pop %v60
    %v62 = vmul.f32 %v60, %v61
    %v63 = vsub.f32 1.0, %v62
    %v64 = vmul.f32 %v61, %v63
    %v65 = vadd.f32 %v61, %v64
    %vm66 = vweird.f32 %v60
    %vm67 = vweird.f32 %v61
    %vm68 = vmor %vm66, %vm67
    %v69 = vsel %vm68, %v61, %v65
    %v70 = vand.u32 2147483647, %v60
    %vm71 = vcmp.eq.f32.partialorder %v70, 8.507059e+37
    %v72 = vand.u32 %v60, 2147483648
    %v73 = vor.u32 1.1754944e-38, %v72
    %v74 = vsel %vm71, %v73, %v69
    %v75 = vmul.f32 1.0, %v74
    %v76 = vtanh.pop %v56
    %78 = vrot.lane.b32.xlu0 %v30, 32
    %v79 = vpop.permute.xlu0 %78
    %v81 = vmul.f32 %v75, %v79
    %83 = vrot.lane.b32.xlu0 %v76, 64
    %v84 = vpop.permute.xlu0 %83
    %v86 = vmul.f32 %v75, %v84
    %88 = vrot.lane.b32.xlu0 %v86, 32
    %v89 = vpop.permute.xlu0 %88
    %v91 = vadd.f32 %v81, %v89
    %v92 = vtanh.pop %v91
    %94 = vrot.lane.b32.xlu0 %v92, 64
    %v95 = vpop.permute.xlu0 %94
    %v97 = vmul.f32 %v75, %v95
    %s98 = scalar_lea.vmem %s0, 2
    %v99 = vld [vmem:[%s98] sm:$0x3]
    %101 = vrot.lane.b32.xlu0 %v97, 32
    %v102 = vpop.permute.xlu0 %101
    %v103 = vsel %vm32, %v102, 0
    %105 = vmatpush.msra.mxu0 0.0
    %106 = vmatpush.msra.mxu0 0.0
    %107 = vmatpush.msra.mxu0 0.0
    %108 = vmatpush.msra.mxu0 0.0
    %109 = vmatpush.msra.mxu0 0.0
    %110 = vmatpush.msra.mxu0 0.0
    %111 = vmatpush.msra.mxu0 0.0
    %112 = vmatpush.msra.mxu0 0.0
    %113 = vmatpush.msra.mxu0 0.0
    %114 = vmatpush.msra.mxu0 0.0
    %115 = vmatpush.msra.mxu0 0.0
    %116 = vmatpush.msra.mxu0 0.0
    %117 = vmatpush.msra.mxu0 %v28
    %118 = vmatpush.msra.mxu0 %v27
    %119 = vmatpush.msra.mxu0 %v26
    %120 = vmatpush.msra.mxu0 %v25
    %121 = vmatmul.f32.gmra.mxu0 %v103
    %v122 = vpop.f32.mrf.mxu0
    %v123 = vadd.f32 0.0, %v122
    %124 = vdwg.mxu0
    %v125 = vadd.f32 %v99, %v123
    %v126 = vxor.u32 %v125, 2147483648
    %v127 = vmul.f32 %v126, 1.442695
    %v128 = vpow.pop %v127
    %v129 = vadd.f32 %v128, 1.0
    %v130 = vrcp.pop %v129
    %v131 = vmul.f32 %v129, %v130
    %v132 = vsub.f32 1.0, %v131
    %v133 = vmul.f32 %v130, %v132
    %v134 = vadd.f32 %v130, %v133
    %vm135 = vweird.f32 %v129
    %vm136 = vweird.f32 %v130
    %vm137 = vmor %vm135, %vm136
    %v138 = vsel %vm137, %v130, %v134
    %v139 = vand.u32 2147483647, %v129
    %vm140 = vcmp.eq.f32.partialorder %v139, 8.507059e+37
    %v141 = vand.u32 %v129, 2147483648
    %v142 = vor.u32 1.1754944e-38, %v141
    %v143 = vsel %vm140, %v142, %v138
    %v144 = vmul.f32 1.0, %v143
    %v145 = vtanh.pop %v125
    %v146 = vmul.f32 %v144, %v91
    %148 = vrot.lane.b32.xlu0 %v145, 64
    %v149 = vpop.permute.xlu0 %148
    %v151 = vmul.f32 %v144, %v149
    %153 = vrot.lane.b32.xlu0 %v151, 32
    %v154 = vpop.permute.xlu0 %153
    %v156 = vadd.f32 %v146, %v154
    %v157 = vtanh.pop %v156
    %159 = vrot.lane.b32.xlu0 %v157, 64
    %v160 = vpop.permute.xlu0 %159
    %v162 = vmul.f32 %v144, %v160
    %s163 = scalar_lea.vmem %s0, 4
    %v164 = vld [vmem:[%s163] sm:$0x3]
    %166 = vrot.lane.b32.xlu0 %v162, 32
    %v167 = vpop.permute.xlu0 %166
    %v168 = vsel %vm32, %v167, 0
    %170 = vmatpush.msra.mxu0 0.0
    %171 = vmatpush.msra.mxu0 0.0
    %172 = vmatpush.msra.mxu0 0.0
    %173 = vmatpush.msra.mxu0 0.0
    %174 = vmatpush.msra.mxu0 0.0
    %175 = vmatpush.msra.mxu0 0.0
    %176 = vmatpush.msra.mxu0 0.0
    %177 = vmatpush.msra.mxu0 0.0
    %178 = vmatpush.msra.mxu0 0.0
    %179 = vmatpush.msra.mxu0 0.0
    %180 = vmatpush.msra.mxu0 0.0
    %181 = vmatpush.msra.mxu0 0.0
    %182 = vmatpush.msra.mxu0 %v28
    %183 = vmatpush.msra.mxu0 %v27
    %184 = vmatpush.msra.mxu0 %v26
    %185 = vmatpush.msra.mxu0 %v25
    %186 = vmatmul.f32.gmra.mxu0 %v168
    %v187 = vpop.f32.mrf.mxu0
    %v188 = vadd.f32 0.0, %v187
    %189 = vdwg.mxu0
    %v190 = vadd.f32 %v164, %v188
    %v191 = vxor.u32 %v190, 2147483648
    %v192 = vmul.f32 %v191, 1.442695
    %v193 = vpow.pop %v192
    %v194 = vadd.f32 %v193, 1.0
    %v195 = vrcp.pop %v194
    %v196 = vmul.f32 %v194, %v195
    %v197 = vsub.f32 1.0, %v196
    %v198 = vmul.f32 %v195, %v197
    %v199 = vadd.f32 %v195, %v198
    %vm200 = vweird.f32 %v194
    %vm201 = vweird.f32 %v195
    %vm202 = vmor %vm200, %vm201
    %v203 = vsel %vm202, %v195, %v199
    %v204 = vand.u32 2147483647, %v194
    %vm205 = vcmp.eq.f32.partialorder %v204, 8.507059e+37
    %v206 = vand.u32 %v194, 2147483648
    %v207 = vor.u32 1.1754944e-38, %v206
    %v208 = vsel %vm205, %v207, %v203
    %v209 = vmul.f32 1.0, %v208
    %v210 = vtanh.pop %v190
    %v211 = vmul.f32 %v209, %v156
    %213 = vrot.lane.b32.xlu0 %v210, 64
    %v214 = vpop.permute.xlu0 %213
    %v216 = vmul.f32 %v209, %v214
    %218 = vrot.lane.b32.xlu0 %v216, 32
    %v219 = vpop.permute.xlu0 %218
    %v221 = vadd.f32 %v211, %v219
    %v222 = vtanh.pop %v221
    %224 = vrot.lane.b32.xlu0 %v222, 64
    %v225 = vpop.permute.xlu0 %224
    %v227 = vmul.f32 %v209, %v225
    %s228 = scalar_lea.vmem %s0, 6
    %v229 = vld [vmem:[%s228] sm:$0x3]
    %231 = vrot.lane.b32.xlu0 %v227, 32
    %v232 = vpop.permute.xlu0 %231
    %v233 = vsel %vm32, %v232, 0
    %235 = vmatpush.msra.mxu0 0.0
    %236 = vmatpush.msra.mxu0 0.0
    %237 = vmatpush.msra.mxu0 0.0
    %238 = vmatpush.msra.mxu0 0.0
    %239 = vmatpush.msra.mxu0 0.0
    %240 = vmatpush.msra.mxu0 0.0
    %241 = vmatpush.msra.mxu0 0.0
    %242 = vmatpush.msra.mxu0 0.0
    %243 = vmatpush.msra.mxu0 0.0
    %244 = vmatpush.msra.mxu0 0.0
    %245 = vmatpush.msra.mxu0 0.0
    %246 = vmatpush.msra.mxu0 0.0
    %247 = vmatpush.msra.mxu0 %v28
    %248 = vmatpush.msra.mxu0 %v27
    %249 = vmatpush.msra.mxu0 %v26
    %250 = vmatpush.msra.mxu0 %v25
    %251 = vmatmul.f32.gmra.mxu0 %v233
    %v252 = vpop.f32.mrf.mxu0
    %v253 = vadd.f32 0.0, %v252
    %254 = vdwg.mxu0
    %v255 = vadd.f32 %v229, %v253
    %v256 = vxor.u32 %v255, 2147483648
    %v257 = vmul.f32 %v256, 1.442695
    %v258 = vpow.pop %v257
    %v259 = vadd.f32 %v258, 1.0
    %v260 = vrcp.pop %v259
    %v261 = vmul.f32 %v259, %v260
    %v262 = vsub.f32 1.0, %v261
    %v263 = vmul.f32 %v260, %v262
    %v264 = vadd.f32 %v260, %v263
    %vm265 = vweird.f32 %v259
    %vm266 = vweird.f32 %v260
    %vm267 = vmor %vm265, %vm266
    %v268 = vsel %vm267, %v260, %v264
    %v269 = vand.u32 2147483647, %v259
    %vm270 = vcmp.eq.f32.partialorder %v269, 8.507059e+37
    %v271 = vand.u32 %v259, 2147483648
    %v272 = vor.u32 1.1754944e-38, %v271
    %v273 = vsel %vm270, %v272, %v268
    %v274 = vmul.f32 1.0, %v273
    %v275 = vtanh.pop %v255
    %v276 = vmul.f32 %v274, %v221
    %278 = vrot.lane.b32.xlu0 %v275, 64
    %v279 = vpop.permute.xlu0 %278
    %v281 = vmul.f32 %v274, %v279
    %283 = vrot.lane.b32.xlu0 %v281, 32
    %v284 = vpop.permute.xlu0 %283
    %v286 = vadd.f32 %v276, %v284
    %v287 = vtanh.pop %v286
    %289 = vrot.lane.b32.xlu0 %v287, 64
    %v290 = vpop.permute.xlu0 %289
    %v292 = vmul.f32 %v274, %v290
    %s293 = scalar_lea.vmem %s0, 8
    %v294 = vld [vmem:[%s293] sm:$0x3]
    %296 = vrot.lane.b32.xlu0 %v292, 32
    %v297 = vpop.permute.xlu0 %296
    %v298 = vsel %vm32, %v297, 0
    %300 = vmatpush.msra.mxu0 0.0
    %301 = vmatpush.msra.mxu0 0.0
    %302 = vmatpush.msra.mxu0 0.0
    %303 = vmatpush.msra.mxu0 0.0
    %304 = vmatpush.msra.mxu0 0.0
    %305 = vmatpush.msra.mxu0 0.0
    %306 = vmatpush.msra.mxu0 0.0
    %307 = vmatpush.msra.mxu0 0.0
    %308 = vmatpush.msra.mxu0 0.0
    %309 = vmatpush.msra.mxu0 0.0
    %310 = vmatpush.msra.mxu0 0.0
    %311 = vmatpush.msra.mxu0 0.0
    %312 = vmatpush.msra.mxu0 %v28
    %313 = vmatpush.msra.mxu0 %v27
    %314 = vmatpush.msra.mxu0 %v26
    %315 = vmatpush.msra.mxu0 %v25
    %316 = vmatmul.f32.gmra.mxu0 %v298
    %v317 = vpop.f32.mrf.mxu0
    %v318 = vadd.f32 0.0, %v317
    %319 = vdwg.mxu0
    %v320 = vadd.f32 %v294, %v318
    %v321 = vxor.u32 %v320, 2147483648
    %v322 = vmul.f32 %v321, 1.442695
    %v323 = vpow.pop %v322
    %v324 = vadd.f32 %v323, 1.0
    %v325 = vrcp.pop %v324
    %v326 = vmul.f32 %v324, %v325
    %v327 = vsub.f32 1.0, %v326
    %v328 = vmul.f32 %v325, %v327
    %v329 = vadd.f32 %v325, %v328
    %vm330 = vweird.f32 %v324
    %vm331 = vweird.f32 %v325
    %vm332 = vmor %vm330, %vm331
    %v333 = vsel %vm332, %v325, %v329
    %v334 = vand.u32 2147483647, %v324
    %vm335 = vcmp.eq.f32.partialorder %v334, 8.507059e+37
    %v336 = vand.u32 %v324, 2147483648
    %v337 = vor.u32 1.1754944e-38, %v336
    %v338 = vsel %vm335, %v337, %v333
    %v339 = vmul.f32 1.0, %v338
    %v340 = vtanh.pop %v320
    %v341 = vmul.f32 %v339, %v286
    %343 = vrot.lane.b32.xlu0 %v340, 64
    %v344 = vpop.permute.xlu0 %343
    %v346 = vmul.f32 %v339, %v344
    %348 = vrot.lane.b32.xlu0 %v346, 32
    %v349 = vpop.permute.xlu0 %348
    %v351 = vadd.f32 %v341, %v349
    %v352 = vtanh.pop %v351
    %354 = vrot.lane.b32.xlu0 %v352, 64
    %v355 = vpop.permute.xlu0 %354
    %v357 = vmul.f32 %v339, %v355
    %s358 = scalar_lea.vmem %s0, 10
    %v359 = vld [vmem:[%s358] sm:$0x3]
    %361 = vrot.lane.b32.xlu0 %v357, 32
    %v362 = vpop.permute.xlu0 %361
    %v363 = vsel %vm32, %v362, 0
    %365 = vmatpush.msra.mxu0 0.0
    %366 = vmatpush.msra.mxu0 0.0
    %367 = vmatpush.msra.mxu0 0.0
    %368 = vmatpush.msra.mxu0 0.0
    %369 = vmatpush.msra.mxu0 0.0
    %370 = vmatpush.msra.mxu0 0.0
    %371 = vmatpush.msra.mxu0 0.0
    %372 = vmatpush.msra.mxu0 0.0
    %373 = vmatpush.msra.mxu0 0.0
    %374 = vmatpush.msra.mxu0 0.0
    %375 = vmatpush.msra.mxu0 0.0
    %376 = vmatpush.msra.mxu0 0.0
    %377 = vmatpush.msra.mxu0 %v28
    %378 = vmatpush.msra.mxu0 %v27
    %379 = vmatpush.msra.mxu0 %v26
    %380 = vmatpush.msra.mxu0 %v25
    %381 = vmatmul.f32.gmra.mxu0 %v363
    %v382 = vpop.f32.mrf.mxu0
    %v383 = vadd.f32 0.0, %v382
    %384 = vdwg.mxu0
    %v385 = vadd.f32 %v359, %v383
    %v386 = vxor.u32 %v385, 2147483648
    %v387 = vmul.f32 %v386, 1.442695
    %v388 = vpow.pop %v387
    %v389 = vadd.f32 %v388, 1.0
    %v390 = vrcp.pop %v389
    %v391 = vmul.f32 %v389, %v390
    %v392 = vsub.f32 1.0, %v391
    %v393 = vmul.f32 %v390, %v392
    %v394 = vadd.f32 %v390, %v393
    %vm395 = vweird.f32 %v389
    %vm396 = vweird.f32 %v390
    %vm397 = vmor %vm395, %vm396
    %v398 = vsel %vm397, %v390, %v394
    %v399 = vand.u32 2147483647, %v389
    %vm400 = vcmp.eq.f32.partialorder %v399, 8.507059e+37
    %v401 = vand.u32 %v389, 2147483648
    %v402 = vor.u32 1.1754944e-38, %v401
    %v403 = vsel %vm400, %v402, %v398
    %v404 = vmul.f32 1.0, %v403
    %v405 = vtanh.pop %v385
    %v406 = vmul.f32 %v404, %v351
    %408 = vrot.lane.b32.xlu0 %v405, 64
    %v409 = vpop.permute.xlu0 %408
    %v411 = vmul.f32 %v404, %v409
    %413 = vrot.lane.b32.xlu0 %v411, 32
    %v414 = vpop.permute.xlu0 %413
    %v416 = vadd.f32 %v406, %v414
    %v417 = vtanh.pop %v416
    %419 = vrot.lane.b32.xlu0 %v417, 64
    %v420 = vpop.permute.xlu0 %419
    %v422 = vmul.f32 %v404, %v420
    %s423 = scalar_lea.vmem %s0, 12
    %v424 = vld [vmem:[%s423] sm:$0x3]
    %426 = vrot.lane.b32.xlu0 %v422, 32
    %v427 = vpop.permute.xlu0 %426
    %v428 = vsel %vm32, %v427, 0
    %430 = vmatpush.msra.mxu0 0.0
    %431 = vmatpush.msra.mxu0 0.0
    %432 = vmatpush.msra.mxu0 0.0
    %433 = vmatpush.msra.mxu0 0.0
    %434 = vmatpush.msra.mxu0 0.0
    %435 = vmatpush.msra.mxu0 0.0
    %436 = vmatpush.msra.mxu0 0.0
    %437 = vmatpush.msra.mxu0 0.0
    %438 = vmatpush.msra.mxu0 0.0
    %439 = vmatpush.msra.mxu0 0.0
    %440 = vmatpush.msra.mxu0 0.0
    %441 = vmatpush.msra.mxu0 0.0
    %442 = vmatpush.msra.mxu0 %v28
    %443 = vmatpush.msra.mxu0 %v27
    %444 = vmatpush.msra.mxu0 %v26
    %445 = vmatpush.msra.mxu0 %v25
    %446 = vmatmul.f32.gmra.mxu0 %v428
    %v447 = vpop.f32.mrf.mxu0
    %v448 = vadd.f32 0.0, %v447
    %449 = vdwg.mxu0
    %v450 = vadd.f32 %v424, %v448
    %v451 = vxor.u32 %v450, 2147483648
    %v452 = vmul.f32 %v451, 1.442695
    %v453 = vpow.pop %v452
    %v454 = vadd.f32 %v453, 1.0
    %v455 = vrcp.pop %v454
    %v456 = vmul.f32 %v454, %v455
    %v457 = vsub.f32 1.0, %v456
    %v458 = vmul.f32 %v455, %v457
    %v459 = vadd.f32 %v455, %v458
    %vm460 = vweird.f32 %v454
    %vm461 = vweird.f32 %v455
    %vm462 = vmor %vm460, %vm461
    %v463 = vsel %vm462, %v455, %v459
    %v464 = vand.u32 2147483647, %v454
    %vm465 = vcmp.eq.f32.partialorder %v464, 8.507059e+37
    %v466 = vand.u32 %v454, 2147483648
    %v467 = vor.u32 1.1754944e-38, %v466
    %v468 = vsel %vm465, %v467, %v463
    %v469 = vmul.f32 1.0, %v468
    %v470 = vtanh.pop %v450
    %v471 = vmul.f32 %v469, %v416
    %473 = vrot.lane.b32.xlu0 %v470, 64
    %v474 = vpop.permute.xlu0 %473
    %v476 = vmul.f32 %v469, %v474
    %478 = vrot.lane.b32.xlu0 %v476, 32
    %v479 = vpop.permute.xlu0 %478
    %v481 = vadd.f32 %v471, %v479
    %v482 = vtanh.pop %v481
    %484 = vrot.lane.b32.xlu0 %v482, 64
    %v485 = vpop.permute.xlu0 %484
    %v487 = vmul.f32 %v469, %v485
    %s488 = scalar_lea.vmem %s0, 14
    %v489 = vld [vmem:[%s488] sm:$0x3]
    %491 = vrot.lane.b32.xlu0 %v487, 32
    %v492 = vpop.permute.xlu0 %491
    %v493 = vsel %vm32, %v492, 0
    %495 = vmatpush.msra.mxu0 0.0
    %496 = vmatpush.msra.mxu0 0.0
    %497 = vmatpush.msra.mxu0 0.0
    %498 = vmatpush.msra.mxu0 0.0
    %499 = vmatpush.msra.mxu0 0.0
    %500 = vmatpush.msra.mxu0 0.0
    %501 = vmatpush.msra.mxu0 0.0
    %502 = vmatpush.msra.mxu0 0.0
    %503 = vmatpush.msra.mxu0 0.0
    %504 = vmatpush.msra.mxu0 0.0
    %505 = vmatpush.msra.mxu0 0.0
    %506 = vmatpush.msra.mxu0 0.0
    %507 = vmatpush.msra.mxu0 %v28
    %508 = vmatpush.msra.mxu0 %v27
    %509 = vmatpush.msra.mxu0 %v26
    %510 = vmatpush.msra.mxu0 %v25
    %511 = vmatmul.f32.gmra.mxu0 %v493
    %v512 = vpop.f32.mrf.mxu0
    %v513 = vadd.f32 0.0, %v512
    %514 = vdwg.mxu0
    %v515 = vadd.f32 %v489, %v513
    %v516 = vxor.u32 %v515, 2147483648
    %v517 = vmul.f32 %v516, 1.442695
    %v518 = vpow.pop %v517
    %v519 = vadd.f32 %v518, 1.0
    %v520 = vrcp.pop %v519
    %v521 = vmul.f32 %v519, %v520
    %v522 = vsub.f32 1.0, %v521
    %v523 = vmul.f32 %v520, %v522
    %v524 = vadd.f32 %v520, %v523
    %vm525 = vweird.f32 %v519
    %vm526 = vweird.f32 %v520
    %vm527 = vmor %vm525, %vm526
    %v528 = vsel %vm527, %v520, %v524
    %v529 = vand.u32 2147483647, %v519
    %vm530 = vcmp.eq.f32.partialorder %v529, 8.507059e+37
    %v531 = vand.u32 %v519, 2147483648
    %v532 = vor.u32 1.1754944e-38, %v531
    %v533 = vsel %vm530, %v532, %v528
    %v534 = vmul.f32 1.0, %v533
    %v535 = vtanh.pop %v515
    %v536 = vmul.f32 %v534, %v481
    %538 = vrot.lane.b32.xlu0 %v535, 64
    %v539 = vpop.permute.xlu0 %538
    %v541 = vmul.f32 %v534, %v539
    %543 = vrot.lane.b32.xlu0 %v541, 32
    %v544 = vpop.permute.xlu0 %543
    %v546 = vadd.f32 %v536, %v544
    %v547 = vtanh.pop %v546
    %549 = vrot.lane.b32.xlu0 %v547, 64
    %v550 = vpop.permute.xlu0 %549
    %v552 = vmul.f32 %v534, %v550
    %554 = vrot.lane.b32.xlu0 %v552, 32
    %v555 = vpop.permute.xlu0 %554
    %vm557 = vcmask 254976
    %558 = vst.msk [vmem:[#allocation2] sm:$0x3] %vm557, %v555
    %560 = vrot.lane.b32.xlu0 %v546, 96
    %v561 = vpop.permute.xlu0 %560
    %563 = vst.msk [vmem:[#allocation3] sm:$0x3] %vm557, %v561
    // Predicated region
    $region22: #{network_single_lstm_forward.3} parent=1 // pred_check
      %p564 = pneg %p18
    $region23: #{network_single_lstm_forward.3} parent=1 // pred_check_branch
      %566 = sbr.rel (%p564) target = $region25
    $region24: #{network_single_lstm_forward.3} parent=1 // pred_region
      %v567 = vld [vmem:[%s2] sm:$0xff]
      %v568 = vld [vmem:[%s2 + $0x8] sm:$0xff]
      %v569 = vld [vmem:[%s2 + $0x10] sm:$0xff]
      %v570 = vld [vmem:[%s2 + $0x18] sm:$0xff]
      %v571 = vld [vmem:[%s3] sm:$0x1]
      %v573 = vperm.slane %v571, 0
      %v575 = vsel %vm32, %v555, 0
      %577 = vmatpush.msra.mxu0 0.0
      %578 = vmatpush.msra.mxu0 0.0
      %579 = vmatpush.msra.mxu0 0.0
      %580 = vmatpush.msra.mxu0 0.0
      %581 = vmatpush.msra.mxu0 0.0
      %582 = vmatpush.msra.mxu0 0.0
      %583 = vmatpush.msra.mxu0 0.0
      %584 = vmatpush.msra.mxu0 0.0
      %585 = vmatpush.msra.mxu0 0.0
      %586 = vmatpush.msra.mxu0 0.0
      %587 = vmatpush.msra.mxu0 0.0
      %588 = vmatpush.msra.mxu0 0.0
      %589 = vmatpush.msra.mxu0 %v570
      %590 = vmatpush.msra.mxu0 %v569
      %591 = vmatpush.msra.mxu0 %v568
      %592 = vmatpush.msra.mxu0 %v567
      %593 = vmatmul.f32.gmra.mxu0 %v575
      %v594 = vpop.f32.mrf.mxu0
      %v595 = vadd.f32 %v573, %v594
      %596 = vdwg.mxu0
      %vm597 = vcmask 25600
      %598 = vst.msk [vmem:[#allocation4] sm:$0x3] %vm597, %v595
    $region25: #{network_single_lstm_forward.3} parent=1 // pred_fallthru
      _
    // Predicated region
    $region26: #{network_single_lstm_forward.3} parent=1 // pred_check
      _
    $region27: #{network_single_lstm_forward.3} parent=1 // pred_check_branch
      %600 = sbr.rel (0) target = $region29
    $region28: #{network_single_lstm_forward.3} parent=1 // pred_region
      %602 = vsyncadd [#allocation5], 0
      %s604 = sshll.u32 [#allocation4], 4
      %s605 = int_to_ptr.vmem [resolvable:$true] %s604
      %s606 = sshll.u32 %s4, 4
      %s607 = int_to_ptr.hbm [resolvable:$true] %s606
      %609 = dma.vmem_to_hbm [thread:$0]  %s605, 32, %s607, [#allocation5]
    $region29: #{network_single_lstm_forward.3} parent=1 // pred_fallthru
      _
    // Predicated region
    $region30: #{network_single_lstm_forward.3} parent=1 // pred_check
      _
    $region31: #{network_single_lstm_forward.3} parent=1 // pred_check_branch
      %611 = sbr.rel (0) target = $region33
    $region32: #{network_single_lstm_forward.3} parent=1 // pred_region
      %613 = dma.done [#allocation5], 32
    $region33: #{network_single_lstm_forward.3} parent=1 // pred_fallthru
      _
    %614 = vsyncpa [#allocation5], 1

</llo_original>
